<compile_context>
chip_gen: v7x
topology: tpu7x:2x2x1
jax: 0.10.0
libtpu: 0.0.40
codegen_flags: <defaults>
</compile_context>

<pallas_src>
import functools

import jax
import jax.numpy as jnp
from jax.experimental import pallas as pl
from jax.experimental.pallas import tpu as pltpu


# ---------------------------------------------------------------------------
# Kernels
# ---------------------------------------------------------------------------
def _norm_single_pass_kernel(x_ref, o_ref):
    """View is (tb, L): each row is one flattened (H, W) plane."""
    x = x_ref[...]
    max_x = jnp.max(x, axis=-1, keepdims=True)   # (tb, 1)
    min_x = jnp.min(x, axis=-1, keepdims=True)   # (tb, 1)
    # Exact reciprocal: only tb values, hidden under the HBM DMA; matches the
    # PyTorch divide to within a ulp.
    inv = 1.0 / (max_x - min_x)
    o_ref[...] = ((x - min_x) * inv).astype(o_ref.dtype)


def _minmax_pass_kernel(x_ref, min_ref, max_ref, min_sc, max_sc, *, l_total, tl):
    """Pass 1 of the large-plane path: running per-row min/max over L tiles."""
    j = pl.program_id(1)

    @pl.when(j == 0)
    def _():
        min_sc[...] = jnp.full(min_sc.shape, jnp.inf, dtype=min_sc.dtype)
        max_sc[...] = jnp.full(max_sc.shape, -jnp.inf, dtype=max_sc.dtype)

    x = x_ref[...].astype(jnp.float32)
    if l_total % tl != 0:
        # Last L tile is partial: mask padded lanes out of the reduction.
        lane = jax.lax.broadcasted_iota(jnp.int32, x.shape, 1)
        valid = (j * tl + lane) < l_total
        x_for_max = jnp.where(valid, x, -jnp.inf)
        x_for_min = jnp.where(valid, x, jnp.inf)
    else:
        x_for_max = x
        x_for_min = x

    max_sc[...] = jnp.maximum(max_sc[...], jnp.max(x_for_max, axis=-1, keepdims=True))
    min_sc[...] = jnp.minimum(min_sc[...], jnp.min(x_for_min, axis=-1, keepdims=True))

    @pl.when(j == pl.num_programs(1) - 1)
    def _():
        min_ref[...] = min_sc[...]
        max_ref[...] = max_sc[...]


def _normalize_pass_kernel(x_ref, min_ref, max_ref, o_ref):
    """Pass 2 of the large-plane path: normalize one (tb, tl) tile."""
    mn = min_ref[...]
    inv = 1.0 / (max_ref[...] - mn)
    o_ref[...] = ((x_ref[...].astype(jnp.float32) - mn) * inv).astype(o_ref.dtype)


# ---------------------------------------------------------------------------
# Wrapper
# ---------------------------------------------------------------------------
def _vmem_capacity_bytes():
    try:
        cap = getattr(pltpu.get_tpu_info(), "vmem_capacity_bytes", None)
        if cap:
            return int(cap)
    except Exception:
        pass
    return 64 * 1024 * 1024   # conservative: v7x per-TensorCore VMEM


def _vmem_limit_bytes(block_bytes, vmem_phys):
    hard_cap = int(vmem_phys * 3 // 4)              # leave on-device headroom
    want = 4 * block_bytes + (8 << 20)              # 2x(in+out) buffers + slack
    return int(max(min(want, hard_cap), min(32 << 20, hard_cap)))


def norm_block(x, *, target_block_bytes=None, force_two_pass=False):
    """Pallas implementation of NormBlock.forward.

    x: (B, H, W).  Returns (x - min_b) / (max_b - min_b), min/max per batch
    element over dims (1, 2).
    """
    B, H, W = x.shape
    L = H * W
    x2 = x.reshape(B, L)                 # lane-dense: reduction covers full plane

    itemsize = jnp.dtype(x.dtype).itemsize
    row_bytes = L * itemsize
    total_bytes = B * row_bytes

    vmem_phys = _vmem_capacity_bytes()
    vmem_budget = int(vmem_phys * 0.6)   # budget for double-buffered in+out blocks
    headroom = 8 << 20

    if target_block_bytes is None:
        # Bigger tiles amortize the ~0.35us/step overhead; v7x's 64 MiB VMEM
        # caps us at ~2 MiB blocks, v5e/v6e (128 MiB) comfortably take 4 MiB.
        target_block_bytes = (4 << 20) if vmem_phys >= (96 << 20) else (2 << 20)

    min_tb = B if B <= 8 else 8
    single_pass_ok = (4 * min_tb * row_bytes + headroom) <= vmem_budget

    if single_pass_ok and not force_two_pass:
        # ------------- single pass: whole (H*W) row per block ---------------
        rows = max(1, target_block_bytes // row_bytes)
        rows = min(rows, max(1, (vmem_budget - headroom) // (4 * row_bytes)))
        if B <= 8 or rows >= B:
            tb = B
        elif rows >= 8:
            tb = (rows // 8) * 8          # sublane dim stays a multiple of 8
        else:
            tb = 8
        # Keep enough grid steps to feed both v7x TensorCores and preserve
        # DMA/compute overlap (a grid of 1 forfeits pipelining entirely).
        if total_bytes > (1 << 20) and B > 8:
            min_steps = 4 if B >= 32 else 2
            tb = min(tb, max(8, ((B // min_steps) // 8) * 8))

        grid = (pl.cdiv(B, tb),)
        block_bytes = tb * row_bytes
        out2 = pl.pallas_call(
            _norm_single_pass_kernel,
            out_shape=jax.ShapeDtypeStruct((B, L), x.dtype),
            grid_spec=pltpu.PrefetchScalarGridSpec(
                num_scalar_prefetch=0,
                grid=grid,
                in_specs=[pl.BlockSpec((tb, L), lambda i: (i, 0))],
                out_specs=pl.BlockSpec((tb, L), lambda i: (i, 0)),
            ),
            compiler_params=pltpu.CompilerParams(
                dimension_semantics=("parallel",),
                vmem_limit_bytes=_vmem_limit_bytes(block_bytes, vmem_phys),
            ),
        )(x2)
        return out2.reshape(B, H, W)

    # ------------- two passes: tile L for very large planes -----------------
    tb = min_tb
    tl = max(128, (target_block_bytes // (tb * itemsize)) // 128 * 128)
    if tl >= L:
        tl = L
    nb = pl.cdiv(B, tb)
    nl = pl.cdiv(L, tl)
    block_bytes = tb * tl * itemsize
    vmem_limit = _vmem_limit_bytes(block_bytes, vmem_phys)

    # Pass 1: per-batch-row running min / max (reduction axis last).
    minmax_kernel = functools.partial(_minmax_pass_kernel, l_total=L, tl=tl)
    mn, mx = pl.pallas_call(
        minmax_kernel,
        out_shape=(jax.ShapeDtypeStruct((B, 1), jnp.float32),
                   jax.ShapeDtypeStruct((B, 1), jnp.float32)),
        grid_spec=pltpu.PrefetchScalarGridSpec(
            num_scalar_prefetch=0,
            grid=(nb, nl),
            in_specs=[pl.BlockSpec((tb, tl), lambda i, j: (i, j))],
            out_specs=(pl.BlockSpec((tb, 1), lambda i, j: (i, 0)),
                       pl.BlockSpec((tb, 1), lambda i, j: (i, 0))),
            scratch_shapes=[pltpu.VMEM((tb, 1), jnp.float32),
                            pltpu.VMEM((tb, 1), jnp.float32)],
        ),
        compiler_params=pltpu.CompilerParams(
            dimension_semantics=("parallel", "arbitrary"),
            vmem_limit_bytes=vmem_limit,
        ),
    )(x2)

    # Pass 2: re-stream the tiles and normalize.
    out2 = pl.pallas_call(
        _normalize_pass_kernel,
        out_shape=jax.ShapeDtypeStruct((B, L), x.dtype),
        grid_spec=pltpu.PrefetchScalarGridSpec(
            num_scalar_prefetch=0,
            grid=(nb, nl),
            in_specs=[pl.BlockSpec((tb, tl), lambda i, j: (i, j)),
                      pl.BlockSpec((tb, 1), lambda i, j: (i, 0)),
                      pl.BlockSpec((tb, 1), lambda i, j: (i, 0))],
            out_specs=pl.BlockSpec((tb, tl), lambda i, j: (i, j)),
        ),
        compiler_params=pltpu.CompilerParams(
            dimension_semantics=("parallel", "parallel"),
            vmem_limit_bytes=vmem_limit,
        ),
    )(x2, mn, mx)
    return out2.reshape(B, H, W)


if __name__ == "__main__":
    key = jax.random.PRNGKey(0)
    k1, k2 = jax.random.split(key)

    def ref_norm(v):
        max_x = jnp.max(v, axis=(1, 2), keepdims=True)
        min_x = jnp.min(v, axis=(1, 2), keepdims=True)
        return (v - min_x) / (max_x - min_x)

    # Small shape matching the module's (B, H, W) forward — single-pass path.
    B, H, W = 2, 16, 16
    x = jax.random.normal(k1, (B, H, W), dtype=jnp.float32)
    out = jax.block_until_ready(norm_block(x))
    ref = ref_norm(x)
    assert out.shape == ref.shape
    assert jnp.allclose(out, ref, atol=1e-6, rtol=1e-6), "single-pass mismatch"

    # Also exercise the large-plane (two-pass, L-tiled) path at a small size,
    # with L = 2080 (not a multiple of the 512 lane tile) so the partial-tile
    # masking is covered.
    x_big = jax.random.normal(k2, (4, 40, 52), dtype=jnp.float32)
    out_big = jax.block_until_ready(
        norm_block(x_big, target_block_bytes=4 * 512 * 4, force_two_pass=True))
    ref_big = ref_norm(x_big)
    assert jnp.allclose(out_big, ref_big, atol=1e-6, rtol=1e-6), "two-pass mismatch"

    print("KERNEL_OK")
</pallas_src>

<mosaic_0001>
module attributes {stable_mosaic.version = 11 : i64} {
  func.func @_norm_single_pass_kernel(%arg0: i32, %arg1: memref<2x256xf32, #tpu.memory_space<vmem>>, %arg2: memref<2x256xf32, #tpu.memory_space<vmem>>) attributes {dimension_semantics = [#tpu.dimension_semantics<parallel>], iteration_bounds = array<i64: 1>, scalar_prefetch = 0 : i64, scratch_operands = 0 : i64, tpu.core_type = #tpu.core_type<tc>, window_params = [{transform_indices = @transform_0, window_bounds = array<i64: 2, 256>}, {transform_indices = @transform_1, window_bounds = array<i64: 2, 256>}]} {
    %c0 = arith.constant 0 : index
    %c0_0 = arith.constant 0 : index
    %0 = vector.load %arg1[%c0, %c0_0] : memref<2x256xf32, #tpu.memory_space<vmem>>, vector<2x256xf32>
    %cst = arith.constant dense<0xFF800000> : vector<2xf32>
    %1 = vector.multi_reduction <maximumf>, %0, %cst [1] : vector<2x256xf32> to vector<2xf32>
    %2 = vector.shape_cast %1 : vector<2xf32> to vector<2x1xf32>
    %cst_1 = arith.constant dense<0x7F800000> : vector<2xf32>
    %3 = vector.multi_reduction <minimumf>, %0, %cst_1 [1] : vector<2x256xf32> to vector<2xf32>
    %4 = vector.shape_cast %3 : vector<2xf32> to vector<2x1xf32>
    %5 = arith.subf %2, %4 : vector<2x1xf32>
    %cst_2 = arith.constant 1.000000e+00 : f32
    %6 = vector.broadcast %cst_2 : f32 to vector<2x1xf32>
    %7 = arith.divf %6, %5 : vector<2x1xf32>
    %8 = vector.broadcast %4 : vector<2x1xf32> to vector<2x256xf32>
    %9 = arith.subf %0, %8 : vector<2x256xf32>
    %10 = vector.broadcast %7 : vector<2x1xf32> to vector<2x256xf32>
    %11 = arith.mulf %9, %10 : vector<2x256xf32>
    %c0_3 = arith.constant 0 : index
    %c0_4 = arith.constant 0 : index
    %12 = vector.load %arg2[%c0_3, %c0_4] : memref<2x256xf32, #tpu.memory_space<vmem>>, vector<2x256xf32>
    tpu.vector_store %arg2[%c0_3, %c0_4], %11 {strides = array<i32>} : memref<2x256xf32, #tpu.memory_space<vmem>>, vector<2x256xf32>,
    return
  }
  func.func @transform_0(%arg0: i32) -> (i32, i32) {
    %c0_i32 = arith.constant 0 : i32
    %c0_i32_0 = arith.constant 0 : i32
    return %arg0, %c0_i32 : i32, i32
  }
  func.func @transform_1(%arg0: i32) -> (i32, i32) {
    %c0_i32 = arith.constant 0 : i32
    %c0_i32_0 = arith.constant 0 : i32
    return %arg0, %c0_i32 : i32, i32
  }
}

</mosaic_0001>

<llo_original>
// kernel: tpu_custom_call.1
$region0: #{tpu_custom_call.1}
  #allocation0 [shape = 'u32[]', space=smem, size = 0x4, offset = 0x4, fixed_abs, tag = 'smem constant byte address 0x4 - core index']
  #allocation1 [shape = 'u32[144,128]{1,0:T(1,128)}', space=vmem, size = 0x12000, scoped, tag = 'internal scratch']
  %s0 = inlined_call_operand.hbm [shape: f32[2,256], index: 0, kind: input, shape index: {}]
  %s1 = inlined_call_operand.hbm [shape: f32[2,256], index: 1, kind: output, shape index: {}]
  %s2 = sld [smem:[#allocation0]]
  $region18: #{tpu_custom_call.1} parent=0
    _
  %s4 = ssub.s32 1, %s2
  %s5 = scalar_select 0, %s4, %s2
  $region1: #{tpu_custom_call.1} parent=0
    #allocation2 [shape = 'u8[2048]{0}', space=vmem, size = 0x800, scoped, tag = 'input window, operand 0, single buffered']
    #allocation3 [shape = 's32[1]{0}', space=sflag, size = 0x4, scoped, tag = 'scoped memory for tpu_custom_call.1']
    #allocation4 [shape = 's32[1]{0}', space=sflag, size = 0x4, scoped, tag = 'scoped memory for tpu_custom_call.1']
    #allocation5 [shape = 'u8[2048]{0}', space=vmem, size = 0x800, scoped, tag = 'output window, operand 0, single buffered']
    %6 = vsyncpa [#allocation3], 0
    %7 = vsyncpa [#allocation4], 0
    // Predicated region
    $region2: #{tpu_custom_call.1} parent=1 // pred_check
      _
    $region3: #{tpu_custom_call.1} parent=1 // pred_check_branch
      %9 = sbr.rel (0) target = $region5
    $region4: #{tpu_custom_call.1} parent=1 // pred_region
      %s11 = ssub.s32 64, 64
      %12 = vsyncadd [#allocation3], %s11
      %s14 = sshll.u32 [#allocation2], 4
      %s15 = int_to_ptr.vmem [resolvable:$true] %s14
      %17 = dma.hbm_to_vmem [thread:$0]  %s0, 64, %s15, [#allocation3]
    $region5: #{tpu_custom_call.1} parent=1 // pred_fallthru
      _
    // Predicated region
    $region6: #{tpu_custom_call.1} parent=1 // pred_check
      _
    $region7: #{tpu_custom_call.1} parent=1 // pred_check_branch
      %19 = sbr.rel (0) target = $region9
    $region8: #{tpu_custom_call.1} parent=1 // pred_region
      %20 = dma.done [#allocation3], 64
    $region9: #{tpu_custom_call.1} parent=1 // pred_fallthru
      _
    %v21 = vld [vmem:[#allocation2] sm:$0xf]
    %v24 = vunpack.c.l.s4 1983009808
    %v25 = vunpack.c.0.s8 %v24
    %v26 = vlaneseq
    %v27 = vshrl.u32 %v26, 7
    %v28 = vsub.s32 %v25, %v27
    %v29 = vrot.slane %v21, %v28
    %v30 = vcombine.high %v29, %v29
    %vm33 = vcmask 1041408
    %v34 = vsel %vm33, %v29, -inf
    %v35 = vsel %vm33, %v30, -inf
    %v36 = vmax.f32 %v34, %v35
    %37 = vmax.xlane.f32.xlu0 %v36
    %v38 = vpop.xlane.xlu0 %37
    %v39 = vsel %vm33, %v29, inf
    %v40 = vsel %vm33, %v30, inf
    %v41 = vmin.f32 %v39, %v40
    %42 = vmin.xlane.f32.xlu0 %v41
    %v43 = vpop.xlane.xlu0 %42
    %v44 = vsub.f32 %v38, %v43
    %v45 = vrcp.pop %v44
    %v46 = vmul.f32 1.0, %v45
    %v49 = vunpack.c.l.s4 269488144
    %v50 = vunpack.c.0.s8 %v49
    %v51 = vlaneseq
    %v52 = vshrl.u32 %v51, 7
    %v53 = vsub.s32 %v50, %v52
    %v54 = vrot.slane %v43, %v53
    %v56 = vsub.f32 %v21, %v54
    %v59 = vunpack.c.l.s4 269488144
    %v60 = vunpack.c.0.s8 %v59
    %v61 = vlaneseq
    %v62 = vshrl.u32 %v61, 7
    %v63 = vsub.s32 %v60, %v62
    %v64 = vrot.slane %v46, %v63
    %v66 = vmul.f32 %v56, %v64
    %67 = vst [vmem:[#allocation5] sm:$0xf] %v66
    // Predicated region
    $region10: #{tpu_custom_call.1} parent=1 // pred_check
      _
    $region11: #{tpu_custom_call.1} parent=1 // pred_check_branch
      %69 = sbr.rel (0) target = $region13
    $region12: #{tpu_custom_call.1} parent=1 // pred_region
      %s71 = ssub.s32 64, 64
      %72 = vsyncadd [#allocation4], %s71
      %s74 = sshll.u32 [#allocation5], 4
      %s75 = int_to_ptr.vmem [resolvable:$true] %s74
      %77 = dma.vmem_to_hbm [thread:$0]  %s75, 64, %s1, [#allocation4]
    $region13: #{tpu_custom_call.1} parent=1 // pred_fallthru
      _
    // Predicated region
    $region14: #{tpu_custom_call.1} parent=1 // pred_check
      _
    $region15: #{tpu_custom_call.1} parent=1 // pred_check_branch
      %79 = sbr.rel (0) target = $region17
    $region16: #{tpu_custom_call.1} parent=1 // pred_region
      %80 = dma.done [#allocation4], 64
    $region17: #{tpu_custom_call.1} parent=1 // pred_fallthru
      _
    %81 = vsyncpa [#allocation3], 1
    %82 = vsyncpa [#allocation4], 1

</llo_original>
